<compile_context>
chip_gen: v7x
topology: tpu7x:2x2x1
jax: 0.10.0
libtpu: 0.0.40
codegen_flags: <defaults>
</compile_context>

<pallas_src>
import jax
import jax.numpy as jnp
from jax import lax
from jax.experimental import pallas as pl
from jax.experimental.pallas import tpu as pltpu


def _divfree_kernel(xT_ref, w1T_ref, b1T_ref, w2c_ref, b2_ref, out_ref):
    # Lane-dense layout: batch on the lane (last) axis.
    x0 = xT_ref[0:1, :]                       # (1, TB)
    x1 = xT_ref[1:2, :]                       # (1, TB)
    w1T = w1T_ref[...]                        # (H, 2)
    b1T = b1T_ref[...]                        # (H, 1)
    w2c = w2c_ref[...]                        # (H, 1)
    b2 = b2_ref[0]                            # scalar (SMEM)

    # Hidden pre-activation: z[h, b] = w1[0,h]*x0[b] + w1[1,h]*x1[b] + b1[h]
    # Pure VPU FMAs -- a K=2 matmul would leave the MXU <1% utilized.
    zT = w1T[:, 0:1] * x0 + w1T[:, 1:2] * x1 + b1T        # (H, TB)
    hT = jnp.tanh(zT)                                      # (H, TB)  (EUP)

    # Potential: psi[b] = sum_h w2[h] * h[h, b] + b2   (sublane reduce, XLU)
    yT = jnp.sum(w2c * hT, axis=0, keepdims=True) + b2     # (1, TB)

    # Gradient of sum(psi) wrt x: g[c, b] = sum_h w1[c,h] * (1 - h^2)[h,b] * w2[h]
    sT = (1.0 - hT * hT) * w2c                              # (H, TB)
    g0 = jnp.sum(w1T[:, 0:1] * sT, axis=0, keepdims=True)   # (1, TB)  d psi/d x0
    g1 = jnp.sum(w1T[:, 1:2] * sT, axis=0, keepdims=True)   # (1, TB)  d psi/d x1

    # Packed, lane-dense output block: one write-back DMA per grid step.
    out_ref[0:1, :] = yT
    out_ref[1:2, :] = g1       # +d psi / d x1
    out_ref[2:3, :] = -g0      # -d psi / d x0


def divfree2d(x, w1, b1, w2row, b2, *, tb=2048):
    """x: (B, 2) f32.  Returns (psi, +dpsi/dx1, -dpsi/dx0), each (B, 1)."""
    B, C = x.shape
    assert C == 2, "DivFree2D expects 2 input coordinates/channels"
    H = w1.shape[1]

    # Lane-aligned tile; pad the batch (pl.cdiv) so no tail rows are dropped.
    lane = 128
    tb = max(lane, (tb // lane) * lane)
    tb_eff = min(tb, pl.cdiv(B, lane) * lane)
    n_blocks = pl.cdiv(B, tb_eff)
    B_pad = n_blocks * tb_eff
    grid = (n_blocks,)

    # Transposed / lane-dense operands (cheap XLA layout plumbing).
    xT = jnp.zeros((2, B_pad), jnp.float32).at[:, :B].set(x.T.astype(jnp.float32))
    w1T = w1.T.astype(jnp.float32)                 # (H, 2)
    b1T = b1.reshape(H, 1).astype(jnp.float32)     # (H, 1)
    w2c = w2row.reshape(H, 1).astype(jnp.float32)  # (H, 1)
    b2s = b2.reshape(1).astype(jnp.float32)        # (1,)  -> SMEM scalar

    cost = pl.CostEstimate(
        flops=16 * B_pad * H,
        transcendentals=B_pad * H,
        bytes_accessed=4 * (2 * B_pad + 3 * B_pad + 4 * H + 1),
    )

    out = pl.pallas_call(
        _divfree_kernel,
        out_shape=jax.ShapeDtypeStruct((3, B_pad), jnp.float32),
        grid_spec=pltpu.PrefetchScalarGridSpec(
            num_scalar_prefetch=0,
            grid=grid,
            in_specs=[
                pl.BlockSpec((2, tb_eff), lambda i: (0, i)),   # x^T tile
                pl.BlockSpec((H, 2), lambda i: (0, 0)),        # W1^T (resident)
                pl.BlockSpec((H, 1), lambda i: (0, 0)),        # b1
                pl.BlockSpec((H, 1), lambda i: (0, 0)),        # W2 column
                pl.BlockSpec(memory_space=pltpu.MemorySpace.SMEM),  # b2 scalar
            ],
            out_specs=pl.BlockSpec((3, tb_eff), lambda i: (0, i)),
        ),
        compiler_params=pltpu.CompilerParams(
            dimension_semantics=("parallel",)),
        cost_estimate=cost,
    )(xT, w1T, b1T, w2c, b2s)

    y = out[0, :B][:, None]
    u = out[1, :B][:, None]
    v = out[2, :B][:, None]
    return y, u, v


def _reference(x, w1, b1, w2row, b2):
    """Pure-JAX reference (forward + autodiff), pure-f32 contractions."""
    hi = lax.Precision.HIGHEST

    def psi(xx):
        h = jnp.tanh(jnp.dot(xx, w1, precision=hi) + b1)
        return jnp.dot(h, w2row.T, precision=hi) + b2

    y = psi(x)
    dydx = jax.grad(lambda xx: jnp.sum(psi(xx)))(x)
    return y, dydx[:, 1:2], -dydx[:, 0:1]


if __name__ == "__main__":
    key = jax.random.PRNGKey(0)
    kx, k1, kb1, k2, kb2 = jax.random.split(key, 5)

    B, H = 256, 32
    x = jax.random.normal(kx, (B, 2), dtype=jnp.float32)

    # base_net = Linear(2, H) -> tanh -> Linear(H, 1)
    w1 = 0.5 * jax.random.normal(k1, (2, H), dtype=jnp.float32)
    b1 = 0.1 * jax.random.normal(kb1, (1, H), dtype=jnp.float32)
    w2row = 0.5 * jax.random.normal(k2, (1, H), dtype=jnp.float32)
    b2 = 0.1 * jax.random.normal(kb2, (1, 1), dtype=jnp.float32)

    y, u, v = divfree2d(x, w1, b1, w2row, b2)
    jax.block_until_ready((y, u, v))

    y_ref, u_ref, v_ref = _reference(x, w1, b1, w2row, b2)
    assert jnp.allclose(y, y_ref, atol=1e-5), "potential mismatch"
    assert jnp.allclose(u, u_ref, atol=1e-5), "u (=d psi/d x1) mismatch"
    assert jnp.allclose(v, v_ref, atol=1e-5), "v (=-d psi/d x0) mismatch"

    print("KERNEL_OK")
</pallas_src>

<mosaic_0001>
module attributes {stable_mosaic.version = 11 : i64} {
  func.func @_divfree_kernel(%arg0: i32, %arg1: memref<2x256xf32, #tpu.memory_space<vmem>>, %arg2: memref<32x2xf32, #tpu.memory_space<vmem>>, %arg3: memref<32x1xf32, #tpu.memory_space<vmem>>, %arg4: memref<32x1xf32, #tpu.memory_space<vmem>>, %arg5: memref<1xf32, #tpu.memory_space<smem>>, %arg6: memref<3x256xf32, #tpu.memory_space<vmem>>) attributes {dimension_semantics = [#tpu.dimension_semantics<parallel>], iteration_bounds = array<i64: 1>, scalar_prefetch = 0 : i64, scratch_operands = 0 : i64, tpu.core_type = #tpu.core_type<tc>, window_params = [{transform_indices = @transform_0, window_bounds = array<i64: 2, 256>}, {pipeline_mode = #tpu.pipeline_mode<synchronous>, transform_indices = @transform_1, window_bounds = array<i64: 32, 2>}, {pipeline_mode = #tpu.pipeline_mode<synchronous>, transform_indices = @transform_2, window_bounds = array<i64: 32, 1>}, {pipeline_mode = #tpu.pipeline_mode<synchronous>, transform_indices = @transform_3, window_bounds = array<i64: 32, 1>}, {transform_indices = @transform_4, window_bounds = array<i64: 1>}, {transform_indices = @transform_5, window_bounds = array<i64: 3, 256>}]} {
    %c0 = arith.constant 0 : index
    %c0_0 = arith.constant 0 : index
    %0 = vector.load %arg1[%c0, %c0_0] : memref<2x256xf32, #tpu.memory_space<vmem>>, vector<1x256xf32>
    %c1 = arith.constant 1 : index
    %c0_1 = arith.constant 0 : index
    %1 = vector.load %arg1[%c1, %c0_1] : memref<2x256xf32, #tpu.memory_space<vmem>>, vector<1x256xf32>
    %c0_2 = arith.constant 0 : index
    %c0_3 = arith.constant 0 : index
    %2 = vector.load %arg2[%c0_2, %c0_3] : memref<32x2xf32, #tpu.memory_space<vmem>>, vector<32x2xf32>
    %c0_4 = arith.constant 0 : index
    %c0_5 = arith.constant 0 : index
    %3 = vector.load %arg3[%c0_4, %c0_5] : memref<32x1xf32, #tpu.memory_space<vmem>>, vector<32x1xf32>
    %c0_6 = arith.constant 0 : index
    %c0_7 = arith.constant 0 : index
    %4 = vector.load %arg4[%c0_6, %c0_7] : memref<32x1xf32, #tpu.memory_space<vmem>>, vector<32x1xf32>
    %c0_8 = arith.constant 0 : index
    %5 = memref.load %arg5[%c0_8] : memref<1xf32, #tpu.memory_space<smem>>
    %6 = vector.extract_strided_slice %2 {offsets = [0, 0], sizes = [32, 1], strides = [1, 1]} : vector<32x2xf32> to vector<32x1xf32>
    %7 = vector.broadcast %6 : vector<32x1xf32> to vector<32x256xf32>
    %8 = vector.broadcast %0 : vector<1x256xf32> to vector<32x256xf32>
    %9 = arith.mulf %7, %8 : vector<32x256xf32>
    %10 = vector.extract_strided_slice %2 {offsets = [0, 1], sizes = [32, 1], strides = [1, 1]} : vector<32x2xf32> to vector<32x1xf32>
    %11 = vector.broadcast %10 : vector<32x1xf32> to vector<32x256xf32>
    %12 = vector.broadcast %1 : vector<1x256xf32> to vector<32x256xf32>
    %13 = arith.mulf %11, %12 : vector<32x256xf32>
    %14 = arith.addf %9, %13 : vector<32x256xf32>
    %15 = vector.broadcast %3 : vector<32x1xf32> to vector<32x256xf32>
    %16 = arith.addf %14, %15 : vector<32x256xf32>
    %17 = math.tanh %16 : vector<32x256xf32>
    %18 = vector.broadcast %4 : vector<32x1xf32> to vector<32x256xf32>
    %19 = arith.mulf %18, %17 : vector<32x256xf32>
    %cst = arith.constant dense<0.000000e+00> : vector<256xf32>
    %20 = vector.multi_reduction <add>, %19, %cst [0] : vector<32x256xf32> to vector<256xf32>
    %21 = vector.shape_cast %20 : vector<256xf32> to vector<1x256xf32>
    %22 = vector.broadcast %5 : f32 to vector<1x256xf32>
    %23 = arith.addf %21, %22 : vector<1x256xf32>
    %24 = arith.mulf %17, %17 : vector<32x256xf32>
    %cst_9 = arith.constant 1.000000e+00 : f32
    %25 = vector.broadcast %cst_9 : f32 to vector<32x256xf32>
    %26 = arith.subf %25, %24 : vector<32x256xf32>
    %27 = vector.broadcast %4 : vector<32x1xf32> to vector<32x256xf32>
    %28 = arith.mulf %26, %27 : vector<32x256xf32>
    %29 = vector.extract_strided_slice %2 {offsets = [0, 0], sizes = [32, 1], strides = [1, 1]} : vector<32x2xf32> to vector<32x1xf32>
    %30 = vector.broadcast %29 : vector<32x1xf32> to vector<32x256xf32>
    %31 = arith.mulf %30, %28 : vector<32x256xf32>
    %cst_10 = arith.constant dense<0.000000e+00> : vector<256xf32>
    %32 = vector.multi_reduction <add>, %31, %cst_10 [0] : vector<32x256xf32> to vector<256xf32>
    %33 = vector.shape_cast %32 : vector<256xf32> to vector<1x256xf32>
    %34 = vector.extract_strided_slice %2 {offsets = [0, 1], sizes = [32, 1], strides = [1, 1]} : vector<32x2xf32> to vector<32x1xf32>
    %35 = vector.broadcast %34 : vector<32x1xf32> to vector<32x256xf32>
    %36 = arith.mulf %35, %28 : vector<32x256xf32>
    %cst_11 = arith.constant dense<0.000000e+00> : vector<256xf32>
    %37 = vector.multi_reduction <add>, %36, %cst_11 [0] : vector<32x256xf32> to vector<256xf32>
    %38 = vector.shape_cast %37 : vector<256xf32> to vector<1x256xf32>
    %c0_12 = arith.constant 0 : index
    %c0_13 = arith.constant 0 : index
    %39 = vector.load %arg6[%c0_12, %c0_13] : memref<3x256xf32, #tpu.memory_space<vmem>>, vector<1x256xf32>
    tpu.vector_store %arg6[%c0_12, %c0_13], %23 {strides = array<i32>} : memref<3x256xf32, #tpu.memory_space<vmem>>, vector<1x256xf32>,
    %c1_14 = arith.constant 1 : index
    %c0_15 = arith.constant 0 : index
    %40 = vector.load %arg6[%c1_14, %c0_15] : memref<3x256xf32, #tpu.memory_space<vmem>>, vector<1x256xf32>
    tpu.vector_store %arg6[%c1_14, %c0_15], %38 {strides = array<i32>} : memref<3x256xf32, #tpu.memory_space<vmem>>, vector<1x256xf32>,
    %cst_16 = arith.constant 0.000000e+00 : f32
    %41 = vector.broadcast %cst_16 : f32 to vector<1x256xf32>
    %42 = arith.subf %41, %33 : vector<1x256xf32>
    %c2 = arith.constant 2 : index
    %c0_17 = arith.constant 0 : index
    %43 = vector.load %arg6[%c2, %c0_17] : memref<3x256xf32, #tpu.memory_space<vmem>>, vector<1x256xf32>
    tpu.vector_store %arg6[%c2, %c0_17], %42 {strides = array<i32>} : memref<3x256xf32, #tpu.memory_space<vmem>>, vector<1x256xf32>,
    return
  }
  func.func @transform_0(%arg0: i32) -> (i32, i32) {
    %c0_i32 = arith.constant 0 : i32
    %c0_i32_0 = arith.constant 0 : i32
    return %c0_i32, %arg0 : i32, i32
  }
  func.func @transform_1(%arg0: i32) -> (i32, i32) {
    %c0_i32 = arith.constant 0 : i32
    %c0_i32_0 = arith.constant 0 : i32
    %c0_i32_1 = arith.constant 0 : i32
    return %c0_i32, %c0_i32_0 : i32, i32
  }
  func.func @transform_2(%arg0: i32) -> (i32, i32) {
    %c0_i32 = arith.constant 0 : i32
    %c0_i32_0 = arith.constant 0 : i32
    %c0_i32_1 = arith.constant 0 : i32
    return %c0_i32, %c0_i32_0 : i32, i32
  }
  func.func @transform_3(%arg0: i32) -> (i32, i32) {
    %c0_i32 = arith.constant 0 : i32
    %c0_i32_0 = arith.constant 0 : i32
    %c0_i32_1 = arith.constant 0 : i32
    return %c0_i32, %c0_i32_0 : i32, i32
  }
  func.func @transform_4(%arg0: i32) -> i32 {
    %c0_i32 = arith.constant 0 : i32
    %c0_i32_0 = arith.constant 0 : i32
    return %c0_i32 : i32
  }
  func.func @transform_5(%arg0: i32) -> (i32, i32) {
    %c0_i32 = arith.constant 0 : i32
    %c0_i32_0 = arith.constant 0 : i32
    return %c0_i32, %arg0 : i32, i32
  }
}

</mosaic_0001>

<llo_original>
// kernel: tpu_custom_call.1
$region0: #{tpu_custom_call.1}
  #allocation0 [shape = 'u32[]', space=smem, size = 0x4, offset = 0x4, fixed_abs, tag = 'smem constant byte address 0x4 - core index']
  #allocation1 [shape = 'u32[144,128]{1,0:T(1,128)}', space=vmem, size = 0x12000, scoped, tag = 'internal scratch']
  #allocation2 [shape = 'f32[1]{0:T(128)S(6)}', space=smem, size = 0x200, scoped, tag = 'scoped memory for tpu_custom_call.1']
  %s0 = inlined_call_operand.vmem [shape: f32[2,256], index: 0, kind: input, shape index: {}]
  %s1 = inlined_call_operand.vmem [shape: f32[32,2], index: 1, kind: input, shape index: {}]
  %s2 = inlined_call_operand.vmem [shape: f32[32,1], index: 2, kind: input, shape index: {}]
  %s3 = inlined_call_operand.vmem [shape: f32[32,1], index: 3, kind: input, shape index: {}]
  %s4 = inlined_call_operand.<no memory space> [shape: f32[1], index: 4, kind: input, shape index: {}]
  %s5 = inlined_call_operand.hbm [shape: f32[3,256], index: 5, kind: output, shape index: {}]
  %s6 = sld [smem:[#allocation0]]
  $region30: #{tpu_custom_call.1} parent=0
    _
  %s8 = ssub.s32 1, %s6
  %s9 = scalar_select 0, %s8, %s6
  %10 = sst [smem:[#allocation2]] %s4
  $region1: #{tpu_custom_call.1} parent=0
    #allocation3 [shape = 'u8[4096]{0}', space=vmem, size = 0x1000, scoped, tag = 'output window, operand 0, single buffered']
    #allocation4 [shape = 's32[1]{0}', space=sflag, size = 0x4, scoped, tag = 'scoped memory for tpu_custom_call.1']
    %11 = vsyncpa [#allocation4], 0
    // Predicated region
    $region2: #{tpu_custom_call.1} parent=1 // pred_check
      _
    $region3: #{tpu_custom_call.1} parent=1 // pred_check_branch
      %13 = sbr.rel (0) target = $region5
    $region4: #{tpu_custom_call.1} parent=1 // pred_region
      _
    $region5: #{tpu_custom_call.1} parent=1 // pred_fallthru
      _
    // Predicated region
    $region6: #{tpu_custom_call.1} parent=1 // pred_check
      _
    $region7: #{tpu_custom_call.1} parent=1 // pred_check_branch
      %15 = sbr.rel (0) target = $region9
    $region8: #{tpu_custom_call.1} parent=1 // pred_region
      _
    $region9: #{tpu_custom_call.1} parent=1 // pred_fallthru
      _
    // Predicated region
    $region10: #{tpu_custom_call.1} parent=1 // pred_check
      _
    $region11: #{tpu_custom_call.1} parent=1 // pred_check_branch
      %17 = sbr.rel (0) target = $region13
    $region12: #{tpu_custom_call.1} parent=1 // pred_region
      _
    $region13: #{tpu_custom_call.1} parent=1 // pred_fallthru
      _
    // Predicated region
    $region14: #{tpu_custom_call.1} parent=1 // pred_check
      _
    $region15: #{tpu_custom_call.1} parent=1 // pred_check_branch
      %19 = sbr.rel (0) target = $region17
    $region16: #{tpu_custom_call.1} parent=1 // pred_region
      _
    $region17: #{tpu_custom_call.1} parent=1 // pred_fallthru
      _
    // Predicated region
    $region18: #{tpu_custom_call.1} parent=1 // pred_check
      _
    $region19: #{tpu_custom_call.1} parent=1 // pred_check_branch
      %21 = sbr.rel (0) target = $region21
    $region20: #{tpu_custom_call.1} parent=1 // pred_region
      _
    $region21: #{tpu_custom_call.1} parent=1 // pred_fallthru
      _
    %v22 = vld [vmem:[%s0] ss:$2 sm:$0x3]
    %s23 = scalar_lea.vmem %s0, 1
    %v24 = vld [vmem:[%s23] ss:$2 sm:$0x3]
    %v25 = vld [vmem:[%s1] sm:$0xff]
    %v26 = vld [vmem:[%s1 + $0x8] sm:$0xff]
    %v27 = vld [vmem:[%s1 + $0x10] sm:$0xff]
    %v28 = vld [vmem:[%s1 + $0x18] sm:$0xff]
    %v29 = vld [vmem:[%s2] sm:$0xff]
    %v30 = vld [vmem:[%s2 + $0x8] sm:$0xff]
    %v31 = vld [vmem:[%s2 + $0x10] sm:$0xff]
    %v32 = vld [vmem:[%s2 + $0x18] sm:$0xff]
    %v33 = vld [vmem:[%s3] sm:$0xff]
    %v34 = vld [vmem:[%s3 + $0x8] sm:$0xff]
    %v35 = vld [vmem:[%s3 + $0x10] sm:$0xff]
    %v36 = vld [vmem:[%s3 + $0x18] sm:$0xff]
    %s37 = sld [smem:[#allocation2]]
    %39 = vset.pattern.permute.xlu0 0
    %40 = vperm.xlu0 %39, %v25
    %v41 = vpop.permute.xlu0 %40
    %44 = vset.pattern.permute.xlu0 0
    %45 = vperm.xlu0 %44, %v26
    %v46 = vpop.permute.xlu0 %45
    %49 = vset.pattern.permute.xlu0 0
    %50 = vperm.xlu0 %49, %v27
    %v51 = vpop.permute.xlu0 %50
    %54 = vset.pattern.permute.xlu0 0
    %55 = vperm.xlu0 %54, %v28
    %v56 = vpop.permute.xlu0 %55
    %v59 = vlaneseq
    %v60 = vshrl.u32 %v59, 7
    %v61 = vsub.s32 0, %v60
    %v62 = vrot.slane %v22, %v61
    %v63 = vlaneseq
    %v64 = vshrl.u32 %v63, 7
    %v65 = vsub.s32 1, %v64
    %v66 = vrot.slane %v22, %v65
    %v69 = vmul.f32 %v41, %v62
    %v70 = vmul.f32 %v41, %v66
    %v71 = vmul.f32 %v46, %v62
    %v72 = vmul.f32 %v46, %v66
    %v73 = vmul.f32 %v51, %v62
    %v74 = vmul.f32 %v51, %v66
    %v75 = vmul.f32 %v56, %v62
    %v76 = vmul.f32 %v56, %v66
    %77 = vset.pattern.permute.xlu0 1
    %78 = vperm.xlu0 %77, %v25
    %v79 = vpop.permute.xlu0 %78
    %81 = vset.pattern.permute.xlu0 1
    %82 = vperm.xlu0 %81, %v26
    %v83 = vpop.permute.xlu0 %82
    %85 = vset.pattern.permute.xlu0 1
    %86 = vperm.xlu0 %85, %v27
    %v87 = vpop.permute.xlu0 %86
    %89 = vset.pattern.permute.xlu0 1
    %90 = vperm.xlu0 %89, %v28
    %v91 = vpop.permute.xlu0 %90
    %v94 = vlaneseq
    %v95 = vshrl.u32 %v94, 7
    %v96 = vsub.s32 0, %v95
    %v97 = vrot.slane %v24, %v96
    %v98 = vlaneseq
    %v99 = vshrl.u32 %v98, 7
    %v100 = vsub.s32 1, %v99
    %v101 = vrot.slane %v24, %v100
    %v104 = vmul.f32 %v79, %v97
    %v105 = vmul.f32 %v79, %v101
    %v106 = vmul.f32 %v83, %v97
    %v107 = vmul.f32 %v83, %v101
    %v108 = vmul.f32 %v87, %v97
    %v109 = vmul.f32 %v87, %v101
    %v110 = vmul.f32 %v91, %v97
    %v111 = vmul.f32 %v91, %v101
    %v112 = vadd.f32 %v69, %v104
    %v113 = vadd.f32 %v70, %v105
    %v114 = vadd.f32 %v71, %v106
    %v115 = vadd.f32 %v72, %v107
    %v116 = vadd.f32 %v73, %v108
    %v117 = vadd.f32 %v74, %v109
    %v118 = vadd.f32 %v75, %v110
    %v119 = vadd.f32 %v76, %v111
    %121 = vset.pattern.permute.xlu0 0
    %122 = vperm.xlu0 %121, %v29
    %v123 = vpop.permute.xlu0 %122
    %126 = vset.pattern.permute.xlu0 0
    %127 = vperm.xlu0 %126, %v30
    %v128 = vpop.permute.xlu0 %127
    %131 = vset.pattern.permute.xlu0 0
    %132 = vperm.xlu0 %131, %v31
    %v133 = vpop.permute.xlu0 %132
    %136 = vset.pattern.permute.xlu0 0
    %137 = vperm.xlu0 %136, %v32
    %v138 = vpop.permute.xlu0 %137
    %v140 = vadd.f32 %v112, %v123
    %v141 = vadd.f32 %v113, %v123
    %v142 = vadd.f32 %v114, %v128
    %v143 = vadd.f32 %v115, %v128
    %v144 = vadd.f32 %v116, %v133
    %v145 = vadd.f32 %v117, %v133
    %v146 = vadd.f32 %v118, %v138
    %v147 = vadd.f32 %v119, %v138
    %v148 = vtanh.pop %v140
    %v149 = vtanh.pop %v141
    %v150 = vtanh.pop %v142
    %v151 = vtanh.pop %v143
    %v152 = vtanh.pop %v144
    %v153 = vtanh.pop %v145
    %v154 = vtanh.pop %v146
    %v155 = vtanh.pop %v147
    %157 = vset.pattern.permute.xlu0 0
    %158 = vperm.xlu0 %157, %v33
    %v159 = vpop.permute.xlu0 %158
    %162 = vset.pattern.permute.xlu0 0
    %163 = vperm.xlu0 %162, %v34
    %v164 = vpop.permute.xlu0 %163
    %167 = vset.pattern.permute.xlu0 0
    %168 = vperm.xlu0 %167, %v35
    %v169 = vpop.permute.xlu0 %168
    %172 = vset.pattern.permute.xlu0 0
    %173 = vperm.xlu0 %172, %v36
    %v174 = vpop.permute.xlu0 %173
    %v176 = vmul.f32 %v159, %v148
    %v177 = vmul.f32 %v159, %v149
    %v178 = vmul.f32 %v164, %v150
    %v179 = vmul.f32 %v164, %v151
    %v180 = vmul.f32 %v169, %v152
    %v181 = vmul.f32 %v169, %v153
    %v182 = vmul.f32 %v174, %v154
    %v183 = vmul.f32 %v174, %v155
    %v184 = vadd.f32 %v176, %v178
    %v185 = vadd.f32 %v184, %v180
    %v186 = vadd.f32 %v185, %v182
    %v187 = vrot.slane %v186, 4
    %v188 = vadd.f32 %v186, %v187
    %v189 = vrot.slane %v188, 2
    %v190 = vadd.f32 %v188, %v189
    %v191 = vrot.slane %v190, 1
    %v192 = vadd.f32 %v190, %v191
    %v193 = vadd.f32 %v177, %v179
    %v194 = vadd.f32 %v193, %v181
    %v195 = vadd.f32 %v194, %v183
    %v196 = vrot.slane %v195, 4
    %v197 = vadd.f32 %v195, %v196
    %v198 = vrot.slane %v197, 2
    %v199 = vadd.f32 %v197, %v198
    %v200 = vrot.slane %v199, 1
    %v201 = vadd.f32 %v199, %v200
    %v202 = vstv %s37
    %v203 = vadd.f32 %v192, %v202
    %v204 = vadd.f32 %v201, %v202
    %v205 = vmul.f32 %v148, %v148
    %v206 = vmul.f32 %v149, %v149
    %v207 = vmul.f32 %v150, %v150
    %v208 = vmul.f32 %v151, %v151
    %v209 = vmul.f32 %v152, %v152
    %v210 = vmul.f32 %v153, %v153
    %v211 = vmul.f32 %v154, %v154
    %v212 = vmul.f32 %v155, %v155
    %v213 = vsub.f32 1.0, %v205
    %v214 = vsub.f32 1.0, %v206
    %v215 = vsub.f32 1.0, %v207
    %v216 = vsub.f32 1.0, %v208
    %v217 = vsub.f32 1.0, %v209
    %v218 = vsub.f32 1.0, %v210
    %v219 = vsub.f32 1.0, %v211
    %v220 = vsub.f32 1.0, %v212
    %v221 = vmul.f32 %v213, %v159
    %v222 = vmul.f32 %v214, %v159
    %v223 = vmul.f32 %v215, %v164
    %v224 = vmul.f32 %v216, %v164
    %v225 = vmul.f32 %v217, %v169
    %v226 = vmul.f32 %v218, %v169
    %v227 = vmul.f32 %v219, %v174
    %v228 = vmul.f32 %v220, %v174
    %v229 = vmul.f32 %v41, %v221
    %v230 = vmul.f32 %v41, %v222
    %v231 = vmul.f32 %v46, %v223
    %v232 = vmul.f32 %v46, %v224
    %v233 = vmul.f32 %v51, %v225
    %v234 = vmul.f32 %v51, %v226
    %v235 = vmul.f32 %v56, %v227
    %v236 = vmul.f32 %v56, %v228
    %v237 = vadd.f32 %v229, %v231
    %v238 = vadd.f32 %v237, %v233
    %v239 = vadd.f32 %v238, %v235
    %v240 = vrot.slane %v239, 4
    %v241 = vadd.f32 %v239, %v240
    %v242 = vrot.slane %v241, 2
    %v243 = vadd.f32 %v241, %v242
    %v244 = vrot.slane %v243, 1
    %v245 = vadd.f32 %v243, %v244
    %v246 = vadd.f32 %v230, %v232
    %v247 = vadd.f32 %v246, %v234
    %v248 = vadd.f32 %v247, %v236
    %v249 = vrot.slane %v248, 4
    %v250 = vadd.f32 %v248, %v249
    %v251 = vrot.slane %v250, 2
    %v252 = vadd.f32 %v250, %v251
    %v253 = vrot.slane %v252, 1
    %v254 = vadd.f32 %v252, %v253
    %v255 = vmul.f32 %v79, %v221
    %v256 = vmul.f32 %v79, %v222
    %v257 = vmul.f32 %v83, %v223
    %v258 = vmul.f32 %v83, %v224
    %v259 = vmul.f32 %v87, %v225
    %v260 = vmul.f32 %v87, %v226
    %v261 = vmul.f32 %v91, %v227
    %v262 = vmul.f32 %v91, %v228
    %v263 = vadd.f32 %v255, %v257
    %v264 = vadd.f32 %v263, %v259
    %v265 = vadd.f32 %v264, %v261
    %v266 = vrot.slane %v265, 4
    %v267 = vadd.f32 %v265, %v266
    %v268 = vrot.slane %v267, 2
    %v269 = vadd.f32 %v267, %v268
    %v270 = vrot.slane %v269, 1
    %v271 = vadd.f32 %v269, %v270
    %v272 = vadd.f32 %v256, %v258
    %v273 = vadd.f32 %v272, %v260
    %v274 = vadd.f32 %v273, %v262
    %v275 = vrot.slane %v274, 4
    %v276 = vadd.f32 %v274, %v275
    %v277 = vrot.slane %v276, 2
    %v278 = vadd.f32 %v276, %v277
    %v279 = vrot.slane %v278, 1
    %v280 = vadd.f32 %v278, %v279
    %v283 = vcombine.low %v203, %v204
    %v285 = vunpack.c.l.s4 1966171168
    %v286 = vunpack.c.0.s8 %v285
    %v287 = vlaneseq
    %v288 = vshrl.u32 %v287, 7
    %v289 = vsub.s32 %v286, %v288
    %v290 = vrot.slane %v283, %v289
    %v292 = vunpack.c.l.s4 1966171168
    %v293 = vunpack.c.0.s8 %v292
    %v294 = vlaneseq
    %v295 = vshrl.u32 %v294, 7
    %v296 = vsub.s32 %v293, %v295
    %v297 = vrot.slane %v290, %v296
    %v299 = vlaneseq
    %vm300 = vcmp.ge.s32.totalorder %v299, 0
    %vm301 = vcmp.lt.s32.totalorder %v299, 256
    %vm302 = vmand %vm300, %vm301
    %303 = vst.msk [vmem:[#allocation3] ss:$4 sm:$0x3] %vm302, %v297
    %v306 = vcombine.low %v271, %v280
    %v308 = vunpack.c.l.s4 1966171168
    %v309 = vunpack.c.0.s8 %v308
    %v310 = vlaneseq
    %v311 = vshrl.u32 %v310, 7
    %v312 = vsub.s32 %v309, %v311
    %v313 = vrot.slane %v306, %v312
    %v315 = vunpack.c.l.s4 1966171168
    %v316 = vunpack.c.0.s8 %v315
    %v317 = vlaneseq
    %v318 = vshrl.u32 %v317, 7
    %v319 = vsub.s32 %v316, %v318
    %v320 = vrot.slane %v313, %v319
    %s322 = scalar_lea.vmem [#allocation3], 1
    %323 = vst.msk [vmem:[%s322] ss:$4 sm:$0x3] %vm302, %v320
    %v324 = vsub.f32 0.0, %v245
    %v325 = vsub.f32 0.0, %v254
    %v328 = vcombine.low %v324, %v325
    %v330 = vunpack.c.l.s4 1966171168
    %v331 = vunpack.c.0.s8 %v330
    %v332 = vlaneseq
    %v333 = vshrl.u32 %v332, 7
    %v334 = vsub.s32 %v331, %v333
    %v335 = vrot.slane %v328, %v334
    %v337 = vunpack.c.l.s4 1966171168
    %v338 = vunpack.c.0.s8 %v337
    %v339 = vlaneseq
    %v340 = vshrl.u32 %v339, 7
    %v341 = vsub.s32 %v338, %v340
    %v342 = vrot.slane %v335, %v341
    %s344 = scalar_lea.vmem [#allocation3], 2
    %345 = vst.msk [vmem:[%s344] ss:$4 sm:$0x3] %vm302, %v342
    // Predicated region
    $region22: #{tpu_custom_call.1} parent=1 // pred_check
      _
    $region23: #{tpu_custom_call.1} parent=1 // pred_check_branch
      %347 = sbr.rel (0) target = $region25
    $region24: #{tpu_custom_call.1} parent=1 // pred_region
      %s349 = ssub.s32 128, 128
      %350 = vsyncadd [#allocation4], %s349
      %s352 = sshll.u32 [#allocation3], 4
      %s353 = int_to_ptr.vmem [resolvable:$true] %s352
      %355 = dma.vmem_to_hbm [thread:$0]  %s353, 128, %s5, [#allocation4]
    $region25: #{tpu_custom_call.1} parent=1 // pred_fallthru
      _
    // Predicated region
    $region26: #{tpu_custom_call.1} parent=1 // pred_check
      _
    $region27: #{tpu_custom_call.1} parent=1 // pred_check_branch
      %357 = sbr.rel (0) target = $region29
    $region28: #{tpu_custom_call.1} parent=1 // pred_region
      %358 = dma.done [#allocation4], 128
    $region29: #{tpu_custom_call.1} parent=1 // pred_fallthru
      _
    %359 = vsyncpa [#allocation4], 1

</llo_original>
